<compile_context>
chip_gen: v5e
topology: v5e:2x2
jax: 0.10.0
libtpu: 0.0.40
codegen_flags: <defaults>
</compile_context>

<pallas_src>
import functools
import math

import jax
import jax.numpy as jnp
from jax.experimental import pallas as pl
from jax.experimental.pallas import tpu as pltpu

VMEM_LIMIT = 64 * 1024 * 1024      # <= physical VMEM on v5e/v6e (128 MiB) and v7x (64 MiB)
MXU_DTYPE = jnp.float32            # set jnp.bfloat16 on v6e/v7x (re-validate tolerance)


# ------------------------------ tiling helpers --------------------------------
def _round_up(x, m):
    return ((x + m - 1) // m) * m


def _row_tile(n, pref=256):
    """Row (batch*seq) tile: large enough to feed the MXU, multiple of 8."""
    return pref if n >= pref else _round_up(n, 8)


def _col_tile(d, pref=512):
    """Output-feature tile: lane-dense multiple of 128 dividing d, else full d."""
    for t in (pref, 256, 128):
        if d % t == 0:
            return t
    return d


def _k_tile(d, pref=512):
    for t in (pref, 256):
        if d % t == 0:
            return t
    return d


def _pad_rows(x, n_pad):
    n = x.shape[0]
    return x if n_pad == n else jnp.pad(x, ((0, n_pad - n), (0, 0)))


# ------------------- fused RMSNorm + matmul (QKV projection) ------------------
def _norm_matmul_kernel(x_ref, g_ref, w_ref, o_ref, *, eps):
    x = x_ref[...].astype(jnp.float32)
    var = jnp.mean(x * x, axis=-1, keepdims=True)
    ln = x * jax.lax.rsqrt(var + eps) * g_ref[...].astype(jnp.float32)
    o_ref[...] = jnp.dot(
        ln.astype(MXU_DTYPE), w_ref[...].astype(MXU_DTYPE),
        preferred_element_type=jnp.float32).astype(o_ref.dtype)


def fused_norm_matmul(x, gamma, w, eps):
    """out = RMSNorm(x; gamma) @ w.  x:(N,D)  w:(D,Dout)."""
    n, d = x.shape
    dout = w.shape[1]
    tm = _row_tile(n)
    n_pad = _round_up(n, tm)
    tn = _col_tile(dout)
    xp = _pad_rows(x, n_pad)
    out = pl.pallas_call(
        functools.partial(_norm_matmul_kernel, eps=eps),
        out_shape=jax.ShapeDtypeStruct((n_pad, dout), x.dtype),
        grid=(n_pad // tm, dout // tn),
        in_specs=[
            pl.BlockSpec((tm, d), lambda i, j: (i, 0)),
            pl.BlockSpec((1, d), lambda i, j: (0, 0)),
            pl.BlockSpec((d, tn), lambda i, j: (0, j)),
        ],
        out_specs=pl.BlockSpec((tm, tn), lambda i, j: (i, j)),
        compiler_params=pltpu.CompilerParams(
            dimension_semantics=("parallel", "parallel"),
            vmem_limit_bytes=VMEM_LIMIT),
    )(xp, gamma.reshape(1, d), w)
    return out[:n]


# ------------- fused RMSNorm + W0/W1 + gated GELU (FFN first half) ------------
def _norm_ffn_kernel(x_ref, g_ref, w0_ref, w1_ref, o_ref, *, eps):
    x = x_ref[...].astype(jnp.float32)
    var = jnp.mean(x * x, axis=-1, keepdims=True)
    ln = x * jax.lax.rsqrt(var + eps) * g_ref[...].astype(jnp.float32)
    ln = ln.astype(MXU_DTYPE)
    gate = jnp.dot(ln, w0_ref[...].astype(MXU_DTYPE),
                   preferred_element_type=jnp.float32)
    up = jnp.dot(ln, w1_ref[...].astype(MXU_DTYPE),
                 preferred_element_type=jnp.float32)
    # torch.nn.GELU() default = exact (erf) gelu
    o_ref[...] = (jax.nn.gelu(gate, approximate=False) * up).astype(o_ref.dtype)


def fused_norm_gated_ffn(x, gamma, w0, w1, eps):
    n, d = x.shape
    dff = w0.shape[1]
    tm = _row_tile(n)
    n_pad = _round_up(n, tm)
    tn = _col_tile(dff)
    xp = _pad_rows(x, n_pad)
    out = pl.pallas_call(
        functools.partial(_norm_ffn_kernel, eps=eps),
        out_shape=jax.ShapeDtypeStruct((n_pad, dff), x.dtype),
        grid=(n_pad // tm, dff // tn),
        in_specs=[
            pl.BlockSpec((tm, d), lambda i, j: (i, 0)),
            pl.BlockSpec((1, d), lambda i, j: (0, 0)),
            pl.BlockSpec((d, tn), lambda i, j: (0, j)),
            pl.BlockSpec((d, tn), lambda i, j: (0, j)),
        ],
        out_specs=pl.BlockSpec((tm, tn), lambda i, j: (i, j)),
        compiler_params=pltpu.CompilerParams(
            dimension_semantics=("parallel", "parallel"),
            vmem_limit_bytes=VMEM_LIMIT),
    )(xp, gamma.reshape(1, d), w0, w1)
    return out[:n]


# -------------------- K/N-tiled linear + fused residual add -------------------
def _linear_res_kernel(x_ref, w_ref, r_ref, o_ref, acc_ref):
    kk = pl.program_id(2)

    @pl.when(kk == 0)
    def _():
        acc_ref[...] = jnp.zeros_like(acc_ref)

    acc_ref[...] += jnp.dot(
        x_ref[...].astype(MXU_DTYPE), w_ref[...].astype(MXU_DTYPE),
        preferred_element_type=jnp.float32)

    @pl.when(kk == pl.num_programs(2) - 1)
    def _():
        o_ref[...] = (acc_ref[...] + r_ref[...].astype(jnp.float32)).astype(o_ref.dtype)


def linear_residual(x, w, residual):
    """out = x @ w + residual.  x:(N,Din)  w:(Din,Dout)  residual:(N,Dout)."""
    n, din = x.shape
    dout = w.shape[1]
    tm = _row_tile(n)
    n_pad = _round_up(n, tm)
    tn = _col_tile(dout)
    tk = _k_tile(din)
    xp = _pad_rows(x, n_pad)
    rp = _pad_rows(residual, n_pad)
    out = pl.pallas_call(
        _linear_res_kernel,
        out_shape=jax.ShapeDtypeStruct((n_pad, dout), x.dtype),
        grid=(n_pad // tm, dout // tn, din // tk),
        in_specs=[
            pl.BlockSpec((tm, tk), lambda i, j, kk: (i, kk)),
            pl.BlockSpec((tk, tn), lambda i, j, kk: (kk, j)),
            pl.BlockSpec((tm, tn), lambda i, j, kk: (i, j)),
        ],
        out_specs=pl.BlockSpec((tm, tn), lambda i, j, kk: (i, j)),
        scratch_shapes=[pltpu.VMEM((tm, tn), jnp.float32)],
        compiler_params=pltpu.CompilerParams(
            dimension_semantics=("parallel", "parallel", "arbitrary"),
            vmem_limit_bytes=VMEM_LIMIT),
    )(xp, w, rp)
    return out[:n]


# --------------- online-softmax (flash-style) GQA attention core --------------
def _attention_kernel(q_ref, k_ref, v_ref, msk_ref, bias_ref, o_ref,
                      mx_ref, l_ref, acc_ref, *, scale, nheads, nkv, dh):
    ki = pl.program_id(2)
    nk = pl.num_programs(2)
    rep = nheads // nkv

    @pl.when(ki == 0)
    def _():
        mx_ref[...] = jnp.full_like(mx_ref, -1e30)
        l_ref[...] = jnp.zeros_like(l_ref)
        acc_ref[...] = jnp.zeros_like(acc_ref)

    q = q_ref[0].astype(jnp.float32)           # (tq, H*dh)
    k = k_ref[0].astype(jnp.float32)           # (tk, Hkv*dh)
    v = v_ref[0].astype(jnp.float32)           # (tk, Hkv*dh)
    msk = msk_ref[0] != 0                      # (tq, tk) bool; True = attend
    bias = bias_ref[...].astype(jnp.float32)   # (H, tq, tk)

    for h in range(nheads):                    # static unroll over heads
        g = h // rep                           # GQA: kv head shared by `rep` q heads
        qh = q[:, h * dh:(h + 1) * dh]
        kh = k[:, g * dh:(g + 1) * dh]
        vh = v[:, g * dh:(g + 1) * dh]
        s = jax.lax.dot_general(qh, kh, (((1,), (1,)), ((), ())),
                                preferred_element_type=jnp.float32)
        s = s * scale + bias[h]
        s = jnp.where(msk, s, jnp.float32(-1e30))          # masked_fill(-inf)
        m_prev = mx_ref[:, h:h + 1]                        # (tq, 1)
        m_new = jnp.maximum(m_prev, s.max(axis=-1, keepdims=True))
        alpha = jnp.exp(m_prev - m_new)
        p = jnp.exp(s - m_new)
        p = jnp.where(msk, p, 0.0)                         # masked_fill(0)
        l_ref[:, h:h + 1] = alpha * l_ref[:, h:h + 1] + p.sum(axis=-1, keepdims=True)
        acc_ref[:, h * dh:(h + 1) * dh] = (
            alpha * acc_ref[:, h * dh:(h + 1) * dh]
            + jnp.dot(p, vh, preferred_element_type=jnp.float32))
        mx_ref[:, h:h + 1] = m_new

    @pl.when(ki == nk - 1)
    def _():
        l = l_ref[...]                                     # (tq, H)
        safe = jnp.where(l == 0.0, 1.0, l)                 # fully-masked row -> 0 out
        inv = pl.reciprocal(safe, approx=True)             # EUP divide
        acc = acc_ref[...]
        outs = [acc[:, h * dh:(h + 1) * dh] * inv[:, h:h + 1] for h in range(nheads)]
        o_ref[0] = jnp.concatenate(outs, axis=-1).astype(o_ref.dtype)


def attention(q, k, v, mask_i8, bias, *, scale, num_heads, num_kv_heads, dim_head):
    """q:(B,S,H*dh)  k,v:(B,S,Hkv*dh)  mask:(B,S,S) int8  bias:(H,S,S).
    Returns (B, S, H*dh) — lane-dense, no transpose needed before wo."""
    B, S, dq = q.shape
    dkv = k.shape[-1]
    H = num_heads
    tq = S if S <= 256 else 256
    tk = S if S <= 256 else 256
    assert S % tq == 0 and S % tk == 0  # TODO(synk): pad S for non-divisible lengths
    kernel = functools.partial(_attention_kernel, scale=scale, nheads=num_heads,
                               nkv=num_kv_heads, dh=dim_head)
    return pl.pallas_call(
        kernel,
        out_shape=jax.ShapeDtypeStruct((B, S, dq), q.dtype),
        grid=(B, S // tq, S // tk),
        in_specs=[
            pl.BlockSpec((1, tq, dq), lambda b, qi, ki: (b, qi, 0)),
            pl.BlockSpec((1, tk, dkv), lambda b, qi, ki: (b, ki, 0)),
            pl.BlockSpec((1, tk, dkv), lambda b, qi, ki: (b, ki, 0)),
            pl.BlockSpec((1, tq, tk), lambda b, qi, ki: (b, qi, ki)),
            pl.BlockSpec((H, tq, tk), lambda b, qi, ki: (0, qi, ki)),
        ],
        out_specs=pl.BlockSpec((1, tq, dq), lambda b, qi, ki: (b, qi, 0)),
        scratch_shapes=[
            pltpu.VMEM((tq, H), jnp.float32),    # running max
            pltpu.VMEM((tq, H), jnp.float32),    # running denom
            pltpu.VMEM((tq, dq), jnp.float32),   # running numerator
        ],
        compiler_params=pltpu.CompilerParams(
            dimension_semantics=("parallel", "parallel", "arbitrary"),
            vmem_limit_bytes=VMEM_LIMIT),
    )(q, k, v, mask_i8, bias)


# ------------------------- TransformerBlock forward --------------------------
def transformer_block(params, x, attention_mask, position_bias, *,
                      num_heads, num_kv_heads, dim_head, eps=1e-6, scale=True):
    B, S, D = x.shape
    N = B * S
    dq = num_heads * dim_head
    dkv = num_kv_heads * dim_head
    h = x.reshape(N, D)

    # --- SelfAttentionBlock: fused RMSNorm + concatenated QKV projection ---
    w_qkv = jnp.concatenate([params["wq"], params["wk"], params["wv"]], axis=1)
    qkv = fused_norm_matmul(h, params["ln_att"], w_qkv, eps)
    q = qkv[:, :dq].reshape(B, S, dq)
    k = qkv[:, dq:dq + dkv].reshape(B, S, dkv)
    v = qkv[:, dq + dkv:].reshape(B, S, dkv)

    sc = (1.0 / math.sqrt(dim_head)) if scale else 1.0
    attn = attention(q, k, v, attention_mask.astype(jnp.int8), position_bias,
                     scale=sc, num_heads=num_heads, num_kv_heads=num_kv_heads,
                     dim_head=dim_head)                      # (B, S, H*dh)
    h = linear_residual(attn.reshape(N, dq), params["wo"], h)   # residual fused

    # --- FFNBlock: fused RMSNorm + W0/W1 + gated gelu, then Wout + residual ---
    a = fused_norm_gated_ffn(h, params["ln_ffn"], params["w0"], params["w1"], eps)
    h = linear_residual(a, params["w_out"], h)                  # residual fused
    return h.reshape(B, S, D)


# --------------------------- Pure-JAX reference -------------------------------
def transformer_block_ref(params, x, attention_mask, position_bias, *,
                          num_heads, num_kv_heads, dim_head, eps=1e-6, scale=True):
    def rms(h, w):
        var = jnp.mean(h * h, axis=-1, keepdims=True)
        return h * jax.lax.rsqrt(var + eps) * w

    B, S, D = x.shape
    h = x
    ln = rms(h, params["ln_att"])
    q = (ln @ params["wq"]).reshape(B, S, num_heads, dim_head).transpose(0, 2, 1, 3)
    k = (ln @ params["wk"]).reshape(B, S, num_kv_heads, dim_head).transpose(0, 2, 1, 3)
    v = (ln @ params["wv"]).reshape(B, S, num_kv_heads, dim_head).transpose(0, 2, 1, 3)
    rep = num_heads // num_kv_heads
    k = jnp.repeat(k, rep, axis=1)
    v = jnp.repeat(v, rep, axis=1)
    sc = (1.0 / math.sqrt(dim_head)) if scale else 1.0
    score = jnp.einsum("bhqd,bhkd->bhqk", q, k) * sc + position_bias[None]
    m = attention_mask[:, None, :, :]
    score = jnp.where(m, score, jnp.float32(-1e30))
    score = jax.nn.softmax(score, axis=-1)
    score = jnp.where(m, score, 0.0)
    attn = jnp.einsum("bhqk,bhkd->bhqd", score, v)
    attn = attn.transpose(0, 2, 1, 3).reshape(B, S, num_heads * dim_head)
    h = h + attn @ params["wo"]
    ln2 = rms(h, params["ln_ffn"])
    a = jax.nn.gelu(ln2 @ params["w0"], approximate=False) * (ln2 @ params["w1"])
    h = h + a @ params["w_out"]
    return h


# ----------------------------------- main -------------------------------------
if __name__ == "__main__":
    B, S, D = 2, 8, 32
    num_heads, num_kv_heads, dim_head = 4, 2, 8
    dim_ff = 64
    eps = 1e-6

    key = jax.random.PRNGKey(0)
    ks = jax.random.split(key, 12)

    def w(k, shape, std=0.02):
        return jax.random.normal(k, shape, jnp.float32) * std

    params = {
        # LayerNorm weights (fm9g LayerNorm inits to ones; perturb to exercise math)
        "ln_att": 1.0 + 0.1 * jax.random.normal(ks[0], (D,), jnp.float32),
        "ln_ffn": 1.0 + 0.1 * jax.random.normal(ks[1], (D,), jnp.float32),
        # Linear weights stored as (dim_in, dim_out): F.linear(x, W_pt) == x @ W_here
        "wq": w(ks[2], (D, num_heads * dim_head)),
        "wk": w(ks[3], (D, num_kv_heads * dim_head)),
        "wv": w(ks[4], (D, num_kv_heads * dim_head)),
        "wo": w(ks[5], (num_heads * dim_head, D)),
        "w0": w(ks[6], (D, dim_ff)),
        "w1": w(ks[7], (D, dim_ff)),
        "w_out": w(ks[8], (dim_ff, D)),
    }

    x = jax.random.normal(ks[9], (B, S, D), jnp.float32)
    # causal attention mask (batch, seq, seq), True = attend
    causal = jnp.tril(jnp.ones((S, S), jnp.bool_))
    attention_mask = jnp.broadcast_to(causal, (B, S, S))
    # relative position bias (num_heads, seq, seq)
    position_bias = 0.05 * jax.random.normal(ks[10], (num_heads, S, S), jnp.float32)

    out = transformer_block(params, x, attention_mask, position_bias,
                            num_heads=num_heads, num_kv_heads=num_kv_heads,
                            dim_head=dim_head, eps=eps, scale=True)
    out = jax.block_until_ready(out)

    ref = transformer_block_ref(params, x, attention_mask, position_bias,
                                num_heads=num_heads, num_kv_heads=num_kv_heads,
                                dim_head=dim_head, eps=eps, scale=True)
    assert out.shape == (B, S, D)
    assert jnp.allclose(out, ref, rtol=2e-3, atol=2e-3), (
        float(jnp.max(jnp.abs(out - ref))))
    print("KERNEL_OK")
</pallas_src>

<mosaic_0001>
module attributes {stable_mosaic.version = 11 : i64} {
  func.func @_norm_matmul_kernel(%arg0: i32, %arg1: i32, %arg2: memref<16x32xf32, #tpu.memory_space<vmem>>, %arg3: memref<1x32xf32, #tpu.memory_space<vmem>>, %arg4: memref<32x64xf32, #tpu.memory_space<vmem>>, %arg5: memref<16x64xf32, #tpu.memory_space<vmem>>) attributes {dimension_semantics = [#tpu.dimension_semantics<parallel>, #tpu.dimension_semantics<parallel>], iteration_bounds = array<i64: 1, 1>, scalar_prefetch = 0 : i64, scratch_operands = 0 : i64, tpu.core_type = #tpu.core_type<tc>, window_params = [{transform_indices = @transform_0, window_bounds = array<i64: 16, 32>}, {pipeline_mode = #tpu.pipeline_mode<synchronous>, transform_indices = @transform_1, window_bounds = array<i64: 1, 32>}, {transform_indices = @transform_2, window_bounds = array<i64: 32, 64>}, {transform_indices = @transform_3, window_bounds = array<i64: 16, 64>}]} {
    %c0 = arith.constant 0 : index
    %c0_0 = arith.constant 0 : index
    %0 = vector.load %arg2[%c0, %c0_0] : memref<16x32xf32, #tpu.memory_space<vmem>>, vector<16x32xf32>
    %1 = arith.mulf %0, %0 : vector<16x32xf32>
    %cst = arith.constant dense<0.000000e+00> : vector<16xf32>
    %2 = vector.multi_reduction <add>, %1, %cst [1] : vector<16x32xf32> to vector<16xf32>
    %3 = vector.shape_cast %2 : vector<16xf32> to vector<16x1xf32>
    %cst_1 = arith.constant 3.200000e+01 : f32
    %4 = vector.broadcast %cst_1 : f32 to vector<16x1xf32>
    %5 = arith.divf %3, %4 : vector<16x1xf32>
    %cst_2 = arith.constant 9.99999997E-7 : f32
    %6 = vector.broadcast %cst_2 : f32 to vector<16x1xf32>
    %7 = arith.addf %5, %6 : vector<16x1xf32>
    %8 = math.rsqrt %7 : vector<16x1xf32>
    %9 = vector.broadcast %8 : vector<16x1xf32> to vector<16x32xf32>
    %10 = arith.mulf %0, %9 : vector<16x32xf32>
    %c0_3 = arith.constant 0 : index
    %c0_4 = arith.constant 0 : index
    %11 = vector.load %arg3[%c0_3, %c0_4] : memref<1x32xf32, #tpu.memory_space<vmem>>, vector<1x32xf32>
    %12 = vector.broadcast %11 : vector<1x32xf32> to vector<16x32xf32>
    %13 = arith.mulf %10, %12 : vector<16x32xf32>
    %c0_5 = arith.constant 0 : index
    %c0_6 = arith.constant 0 : index
    %14 = vector.load %arg4[%c0_5, %c0_6] : memref<32x64xf32, #tpu.memory_space<vmem>>, vector<32x64xf32>
    %cst_7 = arith.constant dense<0.000000e+00> : vector<16x64xf32>
    %15 = tpu.matmul %13, %14, %cst_7 {dimension_numbers = #tpu.dot_dimension_numbers<[1], [0], [0], [1], [0, 0, 1, 1], [], []>} : vector<16x32xf32>, vector<32x64xf32>, vector<16x64xf32> -> vector<16x64xf32>
    %c0_8 = arith.constant 0 : index
    %c0_9 = arith.constant 0 : index
    %16 = vector.load %arg5[%c0_8, %c0_9] : memref<16x64xf32, #tpu.memory_space<vmem>>, vector<16x64xf32>
    tpu.vector_store %arg5[%c0_8, %c0_9], %15 {strides = array<i32>} : memref<16x64xf32, #tpu.memory_space<vmem>>, vector<16x64xf32>,
    return
  }
  func.func @transform_0(%arg0: i32, %arg1: i32) -> (i32, i32) {
    %c0_i32 = arith.constant 0 : i32
    %c0_i32_0 = arith.constant 0 : i32
    return %arg0, %c0_i32 : i32, i32
  }
  func.func @transform_1(%arg0: i32, %arg1: i32) -> (i32, i32) {
    %c0_i32 = arith.constant 0 : i32
    %c0_i32_0 = arith.constant 0 : i32
    %c0_i32_1 = arith.constant 0 : i32
    return %c0_i32, %c0_i32_0 : i32, i32
  }
  func.func @transform_2(%arg0: i32, %arg1: i32) -> (i32, i32) {
    %c0_i32 = arith.constant 0 : i32
    %c0_i32_0 = arith.constant 0 : i32
    return %c0_i32, %arg1 : i32, i32
  }
  func.func @transform_3(%arg0: i32, %arg1: i32) -> (i32, i32) {
    %c0_i32 = arith.constant 0 : i32
    return %arg0, %arg1 : i32, i32
  }
}

</mosaic_0001>

<llo_original>
// kernel: tpu_custom_call.1
$region0: #{tpu_custom_call.1}
  #allocation0 [shape = 'u32[]', space=smem, size = 0x4, offset = 0x4, fixed_abs, tag = 'smem constant byte address 0x4 - core index']
  #allocation1 [shape = 'u32[72,128]{1,0:T(1,128)}', space=vmem, size = 0x9000, scoped, tag = 'internal scratch']
  %s0 = inlined_call_operand.hbm [shape: f32[16,32], index: 0, kind: input, shape index: {}]
  %s1 = inlined_call_operand.hbm [shape: f32[1,32], index: 1, kind: input, shape index: {}]
  %s2 = inlined_call_operand.hbm [shape: f32[32,64], index: 2, kind: input, shape index: {}]
  %s3 = inlined_call_operand.hbm [shape: f32[16,64], index: 3, kind: output, shape index: {}]
  %s4 = sld [smem:[#allocation0]]
  $region34: #{tpu_custom_call.1} parent=0
    _
  %s6 = ssub.s32 1, %s4
  %s7 = scalar_select 0, %s6, %s4
  $region1: #{tpu_custom_call.1} parent=0
    #allocation2 [shape = 'u8[8192]{0}', space=vmem, size = 0x2000, scoped, tag = 'input window, operand 0, single buffered']
    #allocation3 [shape = 's32[1]{0}', space=sflag, size = 0x4, scoped, tag = 'scoped memory for tpu_custom_call.1']
    #allocation4 [shape = 's32[1]{0}', space=sflag, size = 0x4, scoped, tag = 'scoped memory for tpu_custom_call.1']
    #allocation5 [shape = 'u8[512]{0}', space=vmem, size = 0x400, scoped, tag = 'input window, operand 1, single buffered']
    #allocation6 [shape = 's32[1]{0}', space=sflag, size = 0x4, scoped, tag = 'scoped memory for tpu_custom_call.1']
    #allocation7 [shape = 'u8[16384]{0}', space=vmem, size = 0x4000, scoped, tag = 'input window, operand 2, single buffered']
    #allocation8 [shape = 'u8[8192]{0}', space=vmem, size = 0x2000, scoped, tag = 'output window, operand 0, single buffered']
    %8 = vsyncpa [#allocation3], 0
    %9 = vsyncpa [#allocation6], 0
    %10 = vsyncpa [#allocation4], 0
    // Predicated region
    $region2: #{tpu_custom_call.1} parent=1 // pred_check
      _
    $region3: #{tpu_custom_call.1} parent=1 // pred_check_branch
      %12 = sbr.rel (0) target = $region5
    $region4: #{tpu_custom_call.1} parent=1 // pred_region
      %14 = vsyncadd [#allocation3], 0
      %s15 = sshll.u32 %s0, 4
      %s16 = int_to_ptr.hbm [resolvable:$true] %s15
      %s17 = sshll.u32 [#allocation2], 4
      %s18 = int_to_ptr.vmem [resolvable:$true] %s17
      %23 = dma.hbm_to_vmem [thread:$0]  %s16, 256, %s18, [#allocation3], 128, 128, 8
    $region5: #{tpu_custom_call.1} parent=1 // pred_fallthru
      _
    // Predicated region
    $region6: #{tpu_custom_call.1} parent=1 // pred_check
      _
    $region7: #{tpu_custom_call.1} parent=1 // pred_check_branch
      %25 = sbr.rel (0) target = $region9
    $region8: #{tpu_custom_call.1} parent=1 // pred_region
      %27 = vsyncadd [#allocation6], 0
      %s29 = sshll.u32 %s1, 4
      %s30 = int_to_ptr.hbm [resolvable:$true] %s29
      %s31 = sshll.u32 [#allocation5], 4
      %s32 = int_to_ptr.vmem [resolvable:$true] %s31
      %34 = dma.hbm_to_vmem [thread:$0]  %s30, 16, %s32, [#allocation6]
    $region9: #{tpu_custom_call.1} parent=1 // pred_fallthru
      _
    // Predicated region
    $region10: #{tpu_custom_call.1} parent=1 // pred_check
      _
    $region11: #{tpu_custom_call.1} parent=1 // pred_check_branch
      %36 = sbr.rel (0) target = $region13
    $region12: #{tpu_custom_call.1} parent=1 // pred_region
      %38 = vsyncadd [#allocation6], 0
      %s39 = sshll.u32 %s2, 4
      %s40 = int_to_ptr.hbm [resolvable:$true] %s39
      %s41 = sshll.u32 [#allocation7], 4
      %s42 = int_to_ptr.vmem [resolvable:$true] %s41
      %47 = dma.hbm_to_vmem [thread:$0]  %s40, 512, %s42, [#allocation6], 128, 128, 8
    $region13: #{tpu_custom_call.1} parent=1 // pred_fallthru
      _
    // Predicated region
    $region14: #{tpu_custom_call.1} parent=1 // pred_check
      _
    $region15: #{tpu_custom_call.1} parent=1 // pred_check_branch
      %49 = sbr.rel (0) target = $region17
    $region16: #{tpu_custom_call.1} parent=1 // pred_region
      %51 = dma.done [#allocation3], 256
    $region17: #{tpu_custom_call.1} parent=1 // pred_fallthru
      _
    // Predicated region
    $region18: #{tpu_custom_call.1} parent=1 // pred_check
      _
    $region19: #{tpu_custom_call.1} parent=1 // pred_check_branch
      %53 = sbr.rel (0) target = $region21
    $region20: #{tpu_custom_call.1} parent=1 // pred_region
      %55 = dma.done [#allocation6], 16
    $region21: #{tpu_custom_call.1} parent=1 // pred_fallthru
      _
    // Predicated region
    $region22: #{tpu_custom_call.1} parent=1 // pred_check
      _
    $region23: #{tpu_custom_call.1} parent=1 // pred_check_branch
      %57 = sbr.rel (0) target = $region25
    $region24: #{tpu_custom_call.1} parent=1 // pred_region
      %59 = dma.done [#allocation6], 512
    $region25: #{tpu_custom_call.1} parent=1 // pred_fallthru
      _
    %v60 = vld [vmem:[#allocation2] sm:$0xff]
    %v61 = vld [vmem:[#allocation2 + $0x8] sm:$0xff]
    %v62 = vmul.f32 %v60, %v60
    %v63 = vmul.f32 %v61, %v61
    %vm64 = vcmask 261120
    %v65 = vsel %vm64, %v62, 0.0
    %66 = vadd.xlane.f32.xlu0 %v65
    %v67 = vpop.xlane.xlu0 %66
    %v68 = vsel %vm64, %v63, 0.0
    %69 = vadd.xlane.f32.xlu0 %v68
    %v70 = vpop.xlane.xlu0 %69
    %v71 = vrcp.pop 32.0
    %v72 = vmul.f32 32.0, %v71
    %v73 = vsub.f32 1.0, %v72
    %v74 = vmul.f32 %v71, %v73
    %v75 = vadd.f32 %v71, %v74
    %vm76 = vweird.f32 %v71
    %v77 = vsel %vm76, %v71, %v75
    %v78 = vmul.f32 %v67, %v77
    %v79 = vmul.f32 %v70, %v77
    %v80 = vadd.f32 %v78, 1e-06
    %v81 = vadd.f32 %v79, 1e-06
    %v82 = vrsqrt.pop %v80
    %v83 = vmul.f32 %v82, %v80
    %v84 = vmul.f32 %v83, %v82
    %v85 = vmul.f32 0.5, %v84
    %v86 = vsub.f32 1.5, %v85
    %v87 = vmul.f32 %v82, %v86
    %vm88 = vweird.f32 %v80
    %vm89 = vweird.f32 %v82
    %vm90 = vmor %vm88, %vm89
    %v91 = vsel %vm90, %v82, %v87
    %v92 = vrsqrt.pop %v81
    %v93 = vmul.f32 %v92, %v81
    %v94 = vmul.f32 %v93, %v92
    %v95 = vmul.f32 0.5, %v94
    %v96 = vsub.f32 1.5, %v95
    %v97 = vmul.f32 %v92, %v96
    %vm98 = vweird.f32 %v81
    %vm99 = vweird.f32 %v92
    %vm100 = vmor %vm98, %vm99
    %v101 = vsel %vm100, %v92, %v97
    %v102 = vmul.f32 %v60, %v91
    %v103 = vmul.f32 %v61, %v101
    %v104 = vld [vmem:[#allocation5] sm:$0x1]
    %v106 = vperm.slane %v104, 0
    %v108 = vmul.f32 %v102, %v106
    %v109 = vmul.f32 %v103, %v106
    %v110 = vld [vmem:[#allocation7] sm:$0xff]
    %v111 = vld [vmem:[#allocation7 + $0x8] sm:$0xff]
    %v112 = vld [vmem:[#allocation7 + $0x10] sm:$0xff]
    %v113 = vld [vmem:[#allocation7 + $0x18] sm:$0xff]
    %v115 = vsel %vm64, %v108, 0
    %v118 = vsel %vm64, %v109, 0
    %120 = vmatpush.msra.mxu0 0.0
    %121 = vmatpush.msra.mxu0 0.0
    %122 = vmatpush.msra.mxu0 0.0
    %123 = vmatpush.msra.mxu0 0.0
    %124 = vmatpush.msra.mxu0 0.0
    %125 = vmatpush.msra.mxu0 0.0
    %126 = vmatpush.msra.mxu0 0.0
    %127 = vmatpush.msra.mxu0 0.0
    %128 = vmatpush.msra.mxu0 0.0
    %129 = vmatpush.msra.mxu0 0.0
    %130 = vmatpush.msra.mxu0 0.0
    %131 = vmatpush.msra.mxu0 0.0
    %132 = vmatpush.msra.mxu0 %v113
    %133 = vmatpush.msra.mxu0 %v112
    %134 = vmatpush.msra.mxu0 %v111
    %135 = vmatpush.msra.mxu0 %v110
    %136 = vmatmul.f32.gmra.mxu0 %v115
    %v137 = vpop.f32.mrf.mxu0
    %v138 = vadd.f32 0.0, %v137
    %139 = vmatmul.f32.gmra.mxu0 %v118
    %v140 = vpop.f32.mrf.mxu0
    %v141 = vadd.f32 0.0, %v140
    %142 = vdwg.mxu0
    %vm143 = vcmask 523264
    %144 = vst.msk [vmem:[#allocation8] sm:$0xff] %vm143, %v138
    %145 = vst.msk [vmem:[#allocation8 + $0x8] sm:$0xff] %vm143, %v141
    // Predicated region
    $region26: #{tpu_custom_call.1} parent=1 // pred_check
      _
    $region27: #{tpu_custom_call.1} parent=1 // pred_check_branch
      %147 = sbr.rel (0) target = $region29
    $region28: #{tpu_custom_call.1} parent=1 // pred_region
      %149 = vsyncadd [#allocation4], 0
      %s150 = sshll.u32 [#allocation8], 4
      %s151 = int_to_ptr.vmem [resolvable:$true] %s150
      %s152 = sshll.u32 %s3, 4
      %s153 = int_to_ptr.hbm [resolvable:$true] %s152
      %158 = dma.vmem_to_hbm [thread:$0]  %s151, 256, %s153, [#allocation4], 128, 128, 8
    $region29: #{tpu_custom_call.1} parent=1 // pred_fallthru
      _
    // Predicated region
    $region30: #{tpu_custom_call.1} parent=1 // pred_check
      _
    $region31: #{tpu_custom_call.1} parent=1 // pred_check_branch
      %160 = sbr.rel (0) target = $region33
    $region32: #{tpu_custom_call.1} parent=1 // pred_region
      %162 = dma.done [#allocation4], 256
    $region33: #{tpu_custom_call.1} parent=1 // pred_fallthru
      _
    %163 = vsyncpa [#allocation3], 1
    %164 = vsyncpa [#allocation6], 1
    %165 = vsyncpa [#allocation4], 1

</llo_original>
